<compile_context>
chip_gen: v7x
topology: tpu7x:2x2x1
jax: 0.10.0
libtpu: 0.0.40
codegen_flags: <defaults>
</compile_context>

<pallas_src>
import functools

import numpy as np
import jax
import jax.numpy as jnp
from jax.experimental import pallas as pl
from jax.experimental.pallas import tpu as pltpu


# -----------------------------------------------------------------------------
# PSP adaptive-avg-pool expressed as a dense (S, H*W) matrix
# (matches torch.nn.AdaptiveAvgPool2d bin edges).
# -----------------------------------------------------------------------------
def _adaptive_bins(L, s):
    m = np.zeros((s, L), dtype=np.float32)
    for i in range(s):
        start = (i * L) // s
        end = -((-(i + 1) * L) // s)        # ceil((i+1)*L/s)
        m[i, start:end] = 1.0 / (end - start)
    return m


def psp_pool_matrix(H, W, sizes=(1, 3, 6, 8)):
    rows = []
    for s in sizes:
        Ph = _adaptive_bins(H, s)
        Pw = _adaptive_bins(W, s)
        for i in range(s):
            for j in range(s):
                rows.append(np.outer(Ph[i], Pw[j]).reshape(-1))
    M = np.stack(rows).astype(np.float32)   # (S, H*W)
    # Pooling must be a true average (rows sum to 1) for the pool/conv reorder
    # used inside the kernels to be exact.
    assert np.allclose(M.sum(axis=1), 1.0, atol=1e-5)
    return M


def _pick_tile(total, prefs=(1024, 512, 256, 128)):
    for t in prefs:
        if total % t == 0:
            return t
    return total


# -----------------------------------------------------------------------------
# Kernel 1: PSP pooling + fused key/value projection.
# Grid = (N, HW_tiles); the HW axis is a reduction ("arbitrary").
# Exploits sum(M[s, :]) == 1 so pooled_kv = (M @ x^T) @ Wkv + b.
# Outputs pooled key (pre-scaled by key_channels**-0.5) and pooled value,
# lane-dense: (N, Ck, S_pad) / (N, Cv, S_pad), f32.
# -----------------------------------------------------------------------------
def _psp_pool_kernel(x_ref, mt_ref, wkvT_ref, bk_ref, bv_ref,
                     kp_ref, vp_ref, px_acc, *, ck, key_scale):
    t = pl.program_id(1)

    @pl.when(t == 0)
    def _():
        px_acc[...] = jnp.zeros_like(px_acc)

    x = x_ref[0]                      # (C, THW)      compute dtype
    mt = mt_ref[...]                  # (THW, S_pad)  compute dtype
    px_acc[...] += jnp.dot(x, mt, preferred_element_type=jnp.float32)

    @pl.when(t == pl.num_programs(1) - 1)
    def _():
        px = px_acc[...].astype(x_ref.dtype)                     # (C, S_pad)
        kvp = jnp.dot(wkvT_ref[...], px,
                      preferred_element_type=jnp.float32)        # (Ck+Cv, S_pad)
        kp_ref[0] = ((kvp[:ck] + bk_ref[...]) * key_scale).astype(kp_ref.dtype)
        vp_ref[0] = (kvp[ck:] + bv_ref[...]).astype(vp_ref.dtype)


# -----------------------------------------------------------------------------
# Kernel 2: query projection + attention over pooled K/V.
# Grid = (N, HW_tiles); both axes fully parallel (megacore friendly).
# Everything keeps the spatial (query) dim on the lane axis; output is written
# lane-dense as (Co, TQ).
# -----------------------------------------------------------------------------
def _attn_kernel(x_ref, wkT_ref, bk_ref, kp_ref, vp_ref, woT_ref, bo_ref,
                 out_ref, *, s_real):
    cdt = x_ref.dtype                 # matmul ("compute") dtype

    x = x_ref[0]                      # (C, TQ)       cdt
    wkT = wkT_ref[...]                # (Ck, C)       cdt
    bk = bk_ref[...]                  # (Ck, 1)       f32
    kp = kp_ref[0]                    # (Ck, S_pad)   f32 (already * key_scale)
    vp = vp_ref[0]                    # (Cv, S_pad)   f32
    woT = woT_ref[...]                # (Co, Cv)      cdt
    bo = bo_ref[...]                  # (Co, 1)       f32

    # query projection (shared f_key / f_query 1x1 conv), spatial on lanes
    qT = jnp.dot(wkT, x, preferred_element_type=jnp.float32) + bk    # (Ck, TQ)

    # similarity, transposed: simT[s, t] = key_pooled[s] . query[t]
    simT = jax.lax.dot_general(
        kp.astype(cdt), qT.astype(cdt),
        dimension_numbers=(((0,), (0,)), ((), ())),
        preferred_element_type=jnp.float32)                          # (S_pad, TQ)

    # mask padded pooled positions, then softmax over S (sublane axis), f32
    row = jax.lax.broadcasted_iota(jnp.int32, simT.shape, 0)
    simT = jnp.where(row < s_real, simT, -1e30)
    m = jnp.max(simT, axis=0, keepdims=True)                         # (1, TQ)
    e = jnp.exp(simT - m)                                            # (S_pad, TQ)
    denom = jnp.sum(e, axis=0, keepdims=True)                        # (1, TQ)

    # context, normalised AFTER the matmul (touches Cv*TQ elems; EUP reciprocal)
    ctxT = jnp.dot(vp.astype(cdt), e.astype(cdt),
                   preferred_element_type=jnp.float32)               # (Cv, TQ)
    ctxT = ctxT * pl.reciprocal(denom, approx=True)

    # output 1x1 conv (self.W), lane-dense (Co, TQ)
    outT = jnp.dot(woT, ctxT.astype(cdt),
                   preferred_element_type=jnp.float32) + bo
    out_ref[0] = outT.astype(out_ref.dtype)


# -----------------------------------------------------------------------------
# Wrapper
# -----------------------------------------------------------------------------
def self_attention_block(x_nchw, wkT, bk, wvT, bv, woT, bo, M, *,
                         key_channels, compute_dtype=jnp.float32):
    """Forward pass of _SelfAttentionBlock (scale=1).

    x_nchw : (N, C, H, W) f32
    wkT    : (Ck, C)  shared f_key / f_query 1x1-conv weight,  bk: (Ck,)
    wvT    : (Cv, C)  f_value 1x1-conv weight,                 bv: (Cv,)
    woT    : (Co, Cv) self.W 1x1-conv weight,                  bo: (Co,)
    M      : (S, H*W) PSP pooling matrix (rows sum to 1)
    Returns (N, Co, H, W) f32.
    """
    # TODO(synk): scale > 1 (MaxPool2d downsample) path not implemented;
    #             the module default scale=1 is what is exercised here.
    N, C, H, W = x_nchw.shape
    HW = H * W
    Ck, Cv, Co = wkT.shape[0], wvT.shape[0], woT.shape[0]
    S = M.shape[0]
    S_pad = ((S + 127) // 128) * 128

    cdt = compute_dtype
    x_flat = x_nchw.reshape(N, C, HW).astype(cdt)       # pure reshape, no transpose

    # Pad + transpose the (tiny, constant) pooling matrix on the host.
    M_np = np.zeros((S_pad, HW), dtype=np.float32)
    M_np[:S] = np.asarray(M, dtype=np.float32)
    MT_pad = jnp.asarray(M_np.T, dtype=cdt)             # (HW, S_pad)

    wkvT = jnp.concatenate([jnp.asarray(wkT), jnp.asarray(wvT)],
                           axis=0).astype(cdt)          # fused K|V projection
    wkT_c = jnp.asarray(wkT, dtype=cdt)
    woT_c = jnp.asarray(woT, dtype=cdt)
    bk2 = jnp.asarray(bk, jnp.float32).reshape(Ck, 1)
    bv2 = jnp.asarray(bv, jnp.float32).reshape(Cv, 1)
    bo2 = jnp.asarray(bo, jnp.float32).reshape(Co, 1)

    vmem_bytes = 48 * 1024 * 1024   # safe on v5e/v6e/v7x (above default scoped)

    # ---- kernel 1: PSP pooling + fused K/V projection ------------------------
    THW = _pick_tile(HW)
    kp, vp = pl.pallas_call(
        functools.partial(_psp_pool_kernel, ck=Ck,
                          key_scale=float(key_channels) ** -0.5),
        out_shape=(jax.ShapeDtypeStruct((N, Ck, S_pad), jnp.float32),
                   jax.ShapeDtypeStruct((N, Cv, S_pad), jnp.float32)),
        grid_spec=pltpu.PrefetchScalarGridSpec(
            num_scalar_prefetch=0,
            grid=(N, HW // THW),
            in_specs=[
                pl.BlockSpec((1, C, THW), lambda n, t: (n, 0, t)),   # x
                pl.BlockSpec((THW, S_pad), lambda n, t: (t, 0)),     # M^T (padded)
                pl.BlockSpec((Ck + Cv, C), lambda n, t: (0, 0)),     # fused Wk|Wv
                pl.BlockSpec((Ck, 1), lambda n, t: (0, 0)),          # bk
                pl.BlockSpec((Cv, 1), lambda n, t: (0, 0)),          # bv
            ],
            out_specs=[
                pl.BlockSpec((1, Ck, S_pad), lambda n, t: (n, 0, 0)),
                pl.BlockSpec((1, Cv, S_pad), lambda n, t: (n, 0, 0)),
            ],
            scratch_shapes=[pltpu.VMEM((C, S_pad), jnp.float32)],
        ),
        compiler_params=pltpu.CompilerParams(
            dimension_semantics=("parallel", "arbitrary"),
            vmem_limit_bytes=vmem_bytes),
    )(x_flat, MT_pad, wkvT, bk2, bv2)

    # ---- kernel 2: query projection + attention over pooled K/V -------------
    TQ = _pick_tile(HW)
    out_flat = pl.pallas_call(
        functools.partial(_attn_kernel, s_real=S),
        out_shape=jax.ShapeDtypeStruct((N, Co, HW), jnp.float32),
        grid_spec=pltpu.PrefetchScalarGridSpec(
            num_scalar_prefetch=0,
            grid=(N, HW // TQ),
            in_specs=[
                pl.BlockSpec((1, C, TQ), lambda n, q: (n, 0, q)),     # x tile
                pl.BlockSpec((Ck, C), lambda n, q: (0, 0)),           # Wk (=Wq)
                pl.BlockSpec((Ck, 1), lambda n, q: (0, 0)),           # bk
                pl.BlockSpec((1, Ck, S_pad), lambda n, q: (n, 0, 0)), # pooled K
                pl.BlockSpec((1, Cv, S_pad), lambda n, q: (n, 0, 0)), # pooled V
                pl.BlockSpec((Co, Cv), lambda n, q: (0, 0)),          # Wo
                pl.BlockSpec((Co, 1), lambda n, q: (0, 0)),           # bo
            ],
            out_specs=pl.BlockSpec((1, Co, TQ), lambda n, q: (n, 0, q)),
        ),
        compiler_params=pltpu.CompilerParams(
            dimension_semantics=("parallel", "parallel"),
            vmem_limit_bytes=vmem_bytes),
    )(x_flat, wkT_c, bk2, kp, vp, woT_c, bo2)

    return out_flat.reshape(N, Co, H, W)


# -----------------------------------------------------------------------------
# Pure-JAX reference (same math as the PyTorch module, f32, no Pallas)
# -----------------------------------------------------------------------------
def reference(x_nchw, wkT, bk, wvT, bv, woT, bo, M, *, key_channels):
    N, C, H, W = x_nchw.shape
    xf = x_nchw.reshape(N, C, H * W).astype(jnp.float32)
    qk = jnp.einsum("kc,nch->nkh", wkT, xf) + bk[None, :, None]
    v = jnp.einsum("vc,nch->nvh", wvT, xf) + bv[None, :, None]
    kp = jnp.einsum("sh,nkh->nks", M, qk)
    vp = jnp.einsum("sh,nvh->nvs", M, v)
    sim = jnp.einsum("nkh,nks->nhs", qk, kp) * key_channels ** -0.5
    p = jax.nn.softmax(sim, axis=-1)
    ctx = jnp.einsum("nhs,nvs->nvh", p, vp)
    out = jnp.einsum("ov,nvh->noh", woT, ctx) + bo[None, :, None]
    return out.reshape(N, -1, H, W)


if __name__ == "__main__":
    # small shapes consistent with the module
    N, C, H, W = 2, 4, 16, 16
    key_channels, value_channels = 8, 8
    out_channels = C                       # module default: out_channels = in_channels
    psp_sizes = (1, 3, 6, 8)               # S = 1 + 9 + 36 + 64 = 110

    key = jax.random.PRNGKey(0)
    k_x, k_wk, k_bk, k_wv, k_bv, k_wo, k_bo = jax.random.split(key, 7)

    x = jax.random.normal(k_x, (N, C, H, W), dtype=jnp.float32)

    # 1x1 conv weights stored as (out, in) matrices; biases as (out,).
    # NOTE: the original module zero-inits self.W (weight & bias); small random
    # values are used here so the kernel's hot path is actually exercised.
    wkT = 0.1 * jax.random.normal(k_wk, (key_channels, C), dtype=jnp.float32)
    bk = 0.1 * jax.random.normal(k_bk, (key_channels,), dtype=jnp.float32)
    wvT = 0.1 * jax.random.normal(k_wv, (value_channels, C), dtype=jnp.float32)
    bv = 0.1 * jax.random.normal(k_bv, (value_channels,), dtype=jnp.float32)
    woT = 0.1 * jax.random.normal(k_wo, (out_channels, value_channels), dtype=jnp.float32)
    bo = 0.1 * jax.random.normal(k_bo, (out_channels,), dtype=jnp.float32)

    M = jnp.asarray(psp_pool_matrix(H, W, psp_sizes))     # (110, 256)

    ref = reference(x, wkT, bk, wvT, bv, woT, bo, M, key_channels=key_channels)

    # f32 compute path (tolerance covers the approx reciprocal + pool/conv reorder)
    out_f32 = self_attention_block(x, wkT, bk, wvT, bv, woT, bo, M,
                                   key_channels=key_channels,
                                   compute_dtype=jnp.float32)
    out_f32 = jax.block_until_ready(out_f32)
    np.testing.assert_allclose(np.asarray(out_f32), np.asarray(ref),
                               rtol=2e-2, atol=2e-3)

    # bf16 MXU path (recommended on v6e/v7x): loose tolerance vs the f32 reference
    out_bf16 = self_attention_block(x, wkT, bk, wvT, bv, woT, bo, M,
                                    key_channels=key_channels,
                                    compute_dtype=jnp.bfloat16)
    out_bf16 = jax.block_until_ready(out_bf16)
    np.testing.assert_allclose(np.asarray(out_bf16), np.asarray(ref),
                               rtol=1e-1, atol=5e-2)

    print("KERNEL_OK")
</pallas_src>

<mosaic_0001>
module attributes {stable_mosaic.version = 11 : i64} {
  func.func @_psp_pool_kernel(%arg0: i32, %arg1: i32, %arg2: memref<1x4x256xf32, #tpu.memory_space<vmem>>, %arg3: memref<256x128xf32, #tpu.memory_space<vmem>>, %arg4: memref<16x4xf32, #tpu.memory_space<vmem>>, %arg5: memref<8x1xf32, #tpu.memory_space<vmem>>, %arg6: memref<8x1xf32, #tpu.memory_space<vmem>>, %arg7: memref<1x8x128xf32, #tpu.memory_space<vmem>>, %arg8: memref<1x8x128xf32, #tpu.memory_space<vmem>>, %arg9: memref<4x128xf32, #tpu.memory_space<vmem>>) attributes {dimension_semantics = [#tpu.dimension_semantics<parallel>, #tpu.dimension_semantics<arbitrary>], iteration_bounds = array<i64: 2, 1>, scalar_prefetch = 0 : i64, scratch_operands = 1 : i64, tpu.core_type = #tpu.core_type<tc>, window_params = [{transform_indices = @transform_0, window_bounds = array<i64: 1, 4, 256>}, {transform_indices = @transform_1, window_bounds = array<i64: 256, 128>}, {pipeline_mode = #tpu.pipeline_mode<synchronous>, transform_indices = @transform_2, window_bounds = array<i64: 16, 4>}, {pipeline_mode = #tpu.pipeline_mode<synchronous>, transform_indices = @transform_3, window_bounds = array<i64: 8, 1>}, {pipeline_mode = #tpu.pipeline_mode<synchronous>, transform_indices = @transform_4, window_bounds = array<i64: 8, 1>}, {transform_indices = @transform_5, window_bounds = array<i64: 1, 8, 128>}, {transform_indices = @transform_6, window_bounds = array<i64: 1, 8, 128>}]} {
    %c0_i32 = arith.constant 0 : i32
    %0 = arith.cmpi eq, %arg1, %c0_i32 : i32
    %1 = arith.extui %0 : i1 to i32
    %c0_i32_0 = arith.constant 0 : i32
    %2 = arith.cmpi ne, %1, %c0_i32_0 : i32
    scf.if %2 {
      %cst_11 = arith.constant 0.000000e+00 : f32
      %13 = vector.broadcast %cst_11 : f32 to vector<4x128xf32>
      %c0_12 = arith.constant 0 : index
      %c0_13 = arith.constant 0 : index
      %14 = vector.load %arg9[%c0_12, %c0_13] : memref<4x128xf32, #tpu.memory_space<vmem>>, vector<4x128xf32>
      tpu.vector_store %arg9[%c0_12, %c0_13], %13 {strides = array<i32>} : memref<4x128xf32, #tpu.memory_space<vmem>>, vector<4x128xf32>,
    } else {
    }
    %c0 = arith.constant 0 : index
    %c0_1 = arith.constant 0 : index
    %c0_2 = arith.constant 0 : index
    %3 = vector.load %arg2[%c0, %c0_1, %c0_2] : memref<1x4x256xf32, #tpu.memory_space<vmem>>, vector<1x4x256xf32>
    %4 = vector.shape_cast %3 : vector<1x4x256xf32> to vector<4x256xf32>
    %c0_3 = arith.constant 0 : index
    %c0_4 = arith.constant 0 : index
    %5 = vector.load %arg3[%c0_3, %c0_4] : memref<256x128xf32, #tpu.memory_space<vmem>>, vector<256x128xf32>
    %c0_5 = arith.constant 0 : index
    %c0_6 = arith.constant 0 : index
    %6 = vector.load %arg9[%c0_5, %c0_6] : memref<4x128xf32, #tpu.memory_space<vmem>>, vector<4x128xf32>
    %cst = arith.constant dense<0.000000e+00> : vector<4x128xf32>
    %7 = tpu.matmul %4, %5, %cst {dimension_numbers = #tpu.dot_dimension_numbers<[1], [0], [0], [1], [0, 0, 1, 1], [], []>} : vector<4x256xf32>, vector<256x128xf32>, vector<4x128xf32> -> vector<4x128xf32>
    %8 = arith.addf %6, %7 : vector<4x128xf32>
    %c0_7 = arith.constant 0 : index
    %c0_8 = arith.constant 0 : index
    %9 = vector.load %arg9[%c0_7, %c0_8] : memref<4x128xf32, #tpu.memory_space<vmem>>, vector<4x128xf32>
    tpu.vector_store %arg9[%c0_7, %c0_8], %8 {strides = array<i32>} : memref<4x128xf32, #tpu.memory_space<vmem>>, vector<4x128xf32>,
    %c0_i32_9 = arith.constant 0 : i32
    %10 = arith.cmpi eq, %arg1, %c0_i32_9 : i32
    %11 = arith.extui %10 : i1 to i32
    %c0_i32_10 = arith.constant 0 : i32
    %12 = arith.cmpi ne, %11, %c0_i32_10 : i32
    scf.if %12 {
      %c0_11 = arith.constant 0 : index
      %c0_12 = arith.constant 0 : index
      %13 = vector.load %arg9[%c0_11, %c0_12] : memref<4x128xf32, #tpu.memory_space<vmem>>, vector<4x128xf32>
      %c0_13 = arith.constant 0 : index
      %c0_14 = arith.constant 0 : index
      %14 = vector.load %arg4[%c0_13, %c0_14] : memref<16x4xf32, #tpu.memory_space<vmem>>, vector<16x4xf32>
      %cst_15 = arith.constant dense<0.000000e+00> : vector<16x128xf32>
      %15 = tpu.matmul %14, %13, %cst_15 {dimension_numbers = #tpu.dot_dimension_numbers<[1], [0], [0], [1], [0, 0, 1, 1], [], []>} : vector<16x4xf32>, vector<4x128xf32>, vector<16x128xf32> -> vector<16x128xf32>
      %16 = vector.extract_strided_slice %15 {offsets = [0, 0], sizes = [8, 128], strides = [1, 1]} : vector<16x128xf32> to vector<8x128xf32>
      %c0_16 = arith.constant 0 : index
      %c0_17 = arith.constant 0 : index
      %17 = vector.load %arg5[%c0_16, %c0_17] : memref<8x1xf32, #tpu.memory_space<vmem>>, vector<8x1xf32>
      %18 = vector.broadcast %17 : vector<8x1xf32> to vector<8x128xf32>
      %19 = arith.addf %16, %18 : vector<8x128xf32>
      %cst_18 = arith.constant 0.353553385 : f32
      %20 = vector.broadcast %cst_18 : f32 to vector<8x128xf32>
      %21 = arith.mulf %19, %20 : vector<8x128xf32>
      %c0_19 = arith.constant 0 : index
      %c0_20 = arith.constant 0 : index
      %c0_21 = arith.constant 0 : index
      %22 = vector.load %arg7[%c0_19, %c0_20, %c0_21] : memref<1x8x128xf32, #tpu.memory_space<vmem>>, vector<1x8x128xf32>
      %23 = vector.shape_cast %22 : vector<1x8x128xf32> to vector<8x128xf32>
      %24 = vector.shape_cast %21 : vector<8x128xf32> to vector<1x8x128xf32>
      tpu.vector_store %arg7[%c0_19, %c0_20, %c0_21], %24 {strides = array<i32>} : memref<1x8x128xf32, #tpu.memory_space<vmem>>, vector<1x8x128xf32>,
      %25 = vector.extract_strided_slice %15 {offsets = [8, 0], sizes = [8, 128], strides = [1, 1]} : vector<16x128xf32> to vector<8x128xf32>
      %c0_22 = arith.constant 0 : index
      %c0_23 = arith.constant 0 : index
      %26 = vector.load %arg6[%c0_22, %c0_23] : memref<8x1xf32, #tpu.memory_space<vmem>>, vector<8x1xf32>
      %27 = vector.broadcast %26 : vector<8x1xf32> to vector<8x128xf32>
      %28 = arith.addf %25, %27 : vector<8x128xf32>
      %c0_24 = arith.constant 0 : index
      %c0_25 = arith.constant 0 : index
      %c0_26 = arith.constant 0 : index
      %29 = vector.load %arg8[%c0_24, %c0_25, %c0_26] : memref<1x8x128xf32, #tpu.memory_space<vmem>>, vector<1x8x128xf32>
      %30 = vector.shape_cast %29 : vector<1x8x128xf32> to vector<8x128xf32>
      %31 = vector.shape_cast %28 : vector<8x128xf32> to vector<1x8x128xf32>
      tpu.vector_store %arg8[%c0_24, %c0_25, %c0_26], %31 {strides = array<i32>} : memref<1x8x128xf32, #tpu.memory_space<vmem>>, vector<1x8x128xf32>,
    } else {
    }
    return
  }
  func.func @transform_0(%arg0: i32, %arg1: i32) -> (i32, i32, i32) {
    %c0_i32 = arith.constant 0 : i32
    %c0_i32_0 = arith.constant 0 : i32
    return %arg0, %c0_i32, %arg1 : i32, i32, i32
  }
  func.func @transform_1(%arg0: i32, %arg1: i32) -> (i32, i32) {
    %c0_i32 = arith.constant 0 : i32
    %c0_i32_0 = arith.constant 0 : i32
    return %arg1, %c0_i32 : i32, i32
  }
  func.func @transform_2(%arg0: i32, %arg1: i32) -> (i32, i32) {
    %c0_i32 = arith.constant 0 : i32
    %c0_i32_0 = arith.constant 0 : i32
    %c0_i32_1 = arith.constant 0 : i32
    return %c0_i32, %c0_i32_0 : i32, i32
  }
  func.func @transform_3(%arg0: i32, %arg1: i32) -> (i32, i32) {
    %c0_i32 = arith.constant 0 : i32
    %c0_i32_0 = arith.constant 0 : i32
    %c0_i32_1 = arith.constant 0 : i32
    return %c0_i32, %c0_i32_0 : i32, i32
  }
  func.func @transform_4(%arg0: i32, %arg1: i32) -> (i32, i32) {
    %c0_i32 = arith.constant 0 : i32
    %c0_i32_0 = arith.constant 0 : i32
    %c0_i32_1 = arith.constant 0 : i32
    return %c0_i32, %c0_i32_0 : i32, i32
  }
  func.func @transform_5(%arg0: i32, %arg1: i32) -> (i32, i32, i32) {
    %c0_i32 = arith.constant 0 : i32
    %c0_i32_0 = arith.constant 0 : i32
    %c0_i32_1 = arith.constant 0 : i32
    return %arg0, %c0_i32, %c0_i32_0 : i32, i32, i32
  }
  func.func @transform_6(%arg0: i32, %arg1: i32) -> (i32, i32, i32) {
    %c0_i32 = arith.constant 0 : i32
    %c0_i32_0 = arith.constant 0 : i32
    %c0_i32_1 = arith.constant 0 : i32
    return %arg0, %c0_i32, %c0_i32_0 : i32, i32, i32
  }
}

</mosaic_0001>

<llo_original>
// kernel: tpu_custom_call.1
$region0: #{tpu_custom_call.1}
  #allocation0 [shape = 'u32[]', space=smem, size = 0x4, offset = 0x4, fixed_abs, tag = 'smem constant byte address 0x4 - core index']
  #allocation1 [shape = 'u32[144,128]{1,0:T(1,128)}', space=vmem, size = 0x12000, scoped, tag = 'internal scratch']
  #allocation2 [shape = 'f32[4,128]{1,0:T(4,128)}', space=vmem, size = 0x800, scoped, tag = 'scratch operand']
  %s0 = inlined_call_operand.vmem [shape: f32[2,4,256], index: 0, kind: input, shape index: {}]
  %s1 = inlined_call_operand.hbm [shape: f32[256,128], index: 1, kind: input, shape index: {}]
  %s2 = inlined_call_operand.vmem [shape: f32[16,4], index: 2, kind: input, shape index: {}]
  %s3 = inlined_call_operand.vmem [shape: f32[8,1], index: 3, kind: input, shape index: {}]
  %s4 = inlined_call_operand.vmem [shape: f32[8,1], index: 4, kind: input, shape index: {}]
  %s5 = inlined_call_operand.hbm [shape: f32[2,8,128], index: 5, kind: output, shape index: {0}]
  %s6 = inlined_call_operand.hbm [shape: f32[2,8,128], index: 6, kind: output, shape index: {1}]
  %7 = xla_tuple %s5, %s6
  %s8 = sld [smem:[#allocation0]]
  $region73: #{tpu_custom_call.1} parent=0
    _
  %s10 = ssub.s32 1, %s8
  %s11 = scalar_select 0, %s10, %s8
  $region1: #{tpu_custom_call.1} parent=0
    #allocation3 [shape = 'u8[131072]{0}', space=vmem, size = 0x20000, scoped, tag = 'input window, operand 1, single buffered']
    #allocation4 [shape = 's32[2]{0}', space=sflag, size = 0x8, scoped, tag = 'scoped memory for tpu_custom_call.1']
    #allocation5 [shape = 's32[2]{0}', space=sflag, size = 0x8, scoped, tag = 'scoped memory for tpu_custom_call.1']
    #allocation6 [shape = 'u8[8192]{0}', space=vmem, size = 0x2000, scoped, tag = 'output window, operand 0']
    #allocation7 [shape = 'u8[8192]{0}', space=vmem, size = 0x2000, scoped, tag = 'output window, operand 1']
    #allocation8 [shape = 's32[2]{0}', space=sflag, size = 0x8, scoped, tag = 'scoped memory for tpu_custom_call.1']
    %12 = vsyncpa [#allocation4], 0
    %13 = vsyncpa [#allocation5], 0
    %s14 = scalar_lea.sflag [#allocation5], 1
    %15 = vsyncpa %s14, 0
    %16 = vsyncpa [#allocation8], 0
    %s17 = scalar_lea.sflag [#allocation8], 1
    %18 = vsyncpa %s17, 0
    loop: start=0, step=1, limit=4
    $region2: #{tpu_custom_call.1} parent=1 // loop_pre_header
      _
    $region3: #{tpu_custom_call.1} parent=1 // loop_header
      %s20 = sphi 0, %s24
      %p21 = scmp.ge.s32.totalorder %s20, 4
      %s27 = sphi 0, %s39
      %s28 = sphi 0, %s35
      %s29 = sphi 0, %s27
      %s30 = sphi 0, %s28
      %s31 = sphi 0, %s29
      %s32 = sphi 0, %s30
      %s44 = sphi 0, %s46
      %s47 = sphi 0, %s44
      %s48 = sphi 0, %s47
      %s64 = sphi 0, %s48
      %s70 = sphi 0, %s72
      %s73 = sphi 0, %s70
      %s74 = sphi 0, %s73
      %s90 = sphi 0, %s74
      %s94 = sphi 0, %s94
      %s96 = sphi 0, %s94
      %s97 = sphi 0, %s96
      %s111 = sphi 0, %s97
      %s115 = sphi 0, %s115
      %s117 = sphi 0, %s115
      %s118 = sphi 0, %s117
      %s132 = sphi 0, %s118
      %s136 = sphi 0, %s136
      %s138 = sphi 0, %s136
      %s139 = sphi 0, %s138
      %s153 = sphi 0, %s139
      %s159 = sphi 0, %s161
      %s162 = sphi 0, %s159
      %s163 = sphi 0, %s162
      %s179 = sphi 0, %s163
      %s185 = sphi 0, %s187
      %s188 = sphi 0, %s185
      %s189 = sphi 0, %s188
      %s205 = sphi 0, %s189
    $region4: #{tpu_custom_call.1} parent=1 // loop_header_branch
      %23 = sbr.rel (%p21) target = $region8
    $region5: #{tpu_custom_call.1} parent=1 // loop_body
      %s25 = ssub.s32 %s20, 1
      %s26 = ssub.s32 %s20, 2
      %s33 = sadd.s32 1, %s28
      %p34 = scmp.ge.s32.totalorder %s33, 1
      %s35 = scalar_select %p34, 0, %s33
      %s36 = sadd.s32 1, %s27
      %s37 = scalar_select %p34, %s36, %s27
      %p38 = scmp.ge.s32.totalorder %s37, 2
      %s39 = scalar_select %p38, 0, %s37
      %s40 = ssub.s32 %s27, %s39
      %s41 = ssub.s32 %s28, %s35
      %s42 = sor.u32 %s40, %s41
      %p43 = scmp.eq.s32.totalorder %s42, 0
      %s45 = sadd.s32 %s44, 1
      %s46 = scalar_select %p43, %s44, %s45
      %p49 = pneg %p43
      %p50 = scmp.eq.s32.totalorder %s20, 1
      %p51 = por %p49, %p50
      %p52 = scmp.ne.s32.totalorder %s44, %s47
      %p53 = scmp.eq.s32.totalorder %s20, 0
      %p54 = por %p52, %p53
      %p55 = scmp.ne.s32.totalorder %s44, %s47
      %p56 = scmp.eq.s32.totalorder %s25, 1
      %p57 = por %p55, %p56
      %p58 = scmp.ne.s32.totalorder %s47, %s48
      %p59 = scmp.eq.s32.totalorder %s25, 0
      %p60 = por %p58, %p59
      %p61 = scmp.ne.s32.totalorder %s47, %s48
      %p62 = scmp.eq.s32.totalorder %s26, 1
      %p63 = por %p61, %p62
      %p65 = scmp.ne.s32.totalorder %s48, %s64
      %p66 = scmp.eq.s32.totalorder %s26, 0
      %p67 = por %p65, %p66
      %s68 = ssub.s32 %s28, %s35
      %p69 = scmp.eq.s32.totalorder %s68, 0
      %s71 = sadd.s32 %s70, 1
      %s72 = scalar_select %p69, %s70, %s71
      %p75 = pneg %p69
      %p76 = scmp.eq.s32.totalorder %s20, 1
      %p77 = por %p75, %p76
      %p78 = scmp.ne.s32.totalorder %s70, %s73
      %p79 = scmp.eq.s32.totalorder %s20, 0
      %p80 = por %p78, %p79
      %p81 = scmp.ne.s32.totalorder %s70, %s73
      %p82 = scmp.eq.s32.totalorder %s25, 1
      %p83 = por %p81, %p82
      %p84 = scmp.ne.s32.totalorder %s73, %s74
      %p85 = scmp.eq.s32.totalorder %s25, 0
      %p86 = por %p84, %p85
      %p87 = scmp.ne.s32.totalorder %s73, %s74
      %p88 = scmp.eq.s32.totalorder %s26, 1
      %p89 = por %p87, %p88
      %p91 = scmp.ne.s32.totalorder %s74, %s90
      %p92 = scmp.eq.s32.totalorder %s26, 0
      %p93 = por %p91, %p92
      %s95 = sadd.s32 %s94, 1
      %p98 = scmp.eq.s32.totalorder %s20, 1
      %p99 = scmp.ne.s32.totalorder %s94, %s96
      %p100 = scmp.eq.s32.totalorder %s20, 0
      %p101 = por %p99, %p100
      %p102 = scmp.ne.s32.totalorder %s94, %s96
      %p103 = scmp.eq.s32.totalorder %s25, 1
      %p104 = por %p102, %p103
      %p105 = scmp.ne.s32.totalorder %s96, %s97
      %p106 = scmp.eq.s32.totalorder %s25, 0
      %p107 = por %p105, %p106
      %p108 = scmp.ne.s32.totalorder %s96, %s97
      %p109 = scmp.eq.s32.totalorder %s26, 1
      %p110 = por %p108, %p109
      %p112 = scmp.ne.s32.totalorder %s97, %s111
      %p113 = scmp.eq.s32.totalorder %s26, 0
      %p114 = por %p112, %p113
      %s116 = sadd.s32 %s115, 1
      %p119 = scmp.eq.s32.totalorder %s20, 1
      %p120 = scmp.ne.s32.totalorder %s115, %s117
      %p121 = scmp.eq.s32.totalorder %s20, 0
      %p122 = por %p120, %p121
      %p123 = scmp.ne.s32.totalorder %s115, %s117
      %p124 = scmp.eq.s32.totalorder %s25, 1
      %p125 = por %p123, %p124
      %p126 = scmp.ne.s32.totalorder %s117, %s118
      %p127 = scmp.eq.s32.totalorder %s25, 0
      %p128 = por %p126, %p127
      %p129 = scmp.ne.s32.totalorder %s117, %s118
      %p130 = scmp.eq.s32.totalorder %s26, 1
      %p131 = por %p129, %p130
      %p133 = scmp.ne.s32.totalorder %s118, %s132
      %p134 = scmp.eq.s32.totalorder %s26, 0
      %p135 = por %p133, %p134
      %s137 = sadd.s32 %s136, 1
      %p140 = scmp.eq.s32.totalorder %s20, 1
      %p141 = scmp.ne.s32.totalorder %s136, %s138
      %p142 = scmp.eq.s32.totalorder %s20, 0
      %p143 = por %p141, %p142
      %p144 = scmp.ne.s32.totalorder %s136, %s138
      %p145 = scmp.eq.s32.totalorder %s25, 1
      %p146 = por %p144, %p145
      %p147 = scmp.ne.s32.totalorder %s138, %s139
      %p148 = scmp.eq.s32.totalorder %s25, 0
      %p149 = por %p147, %p148
      %p150 = scmp.ne.s32.totalorder %s138, %s139
      %p151 = scmp.eq.s32.totalorder %s26, 1
      %p152 = por %p150, %p151
      %p154 = scmp.ne.s32.totalorder %s139, %s153
      %p155 = scmp.eq.s32.totalorder %s26, 0
      %p156 = por %p154, %p155
      %s157 = ssub.s32 %s27, %s39
      %p158 = scmp.eq.s32.totalorder %s157, 0
      %s160 = sadd.s32 %s159, 1
      %s161 = scalar_select %p158, %s159, %s160
      %p164 = pneg %p158
      %p165 = scmp.eq.s32.totalorder %s20, 1
      %p166 = por %p164, %p165
      %p167 = scmp.ne.s32.totalorder %s159, %s162
      %p168 = scmp.eq.s32.totalorder %s20, 0
      %p169 = por %p167, %p168
      %p170 = scmp.ne.s32.totalorder %s159, %s162
      %p171 = scmp.eq.s32.totalorder %s25, 1
      %p172 = por %p170, %p171
      %p173 = scmp.ne.s32.totalorder %s162, %s163
      %p174 = scmp.eq.s32.totalorder %s25, 0
      %p175 = por %p173, %p174
      %p176 = scmp.ne.s32.totalorder %s162, %s163
      %p177 = scmp.eq.s32.totalorder %s26, 1
      %p178 = por %p176, %p177
      %p180 = scmp.ne.s32.totalorder %s163, %s179
      %p181 = scmp.eq.s32.totalorder %s26, 0
      %p182 = por %p180, %p181
      %s183 = ssub.s32 %s27, %s39
      %p184 = scmp.eq.s32.totalorder %s183, 0
      %s186 = sadd.s32 %s185, 1
      %s187 = scalar_select %p184, %s185, %s186
      %p190 = pneg %p184
      %p191 = scmp.eq.s32.totalorder %s20, 1
      %p192 = por %p190, %p191
      %p193 = scmp.ne.s32.totalorder %s185, %s188
      %p194 = scmp.eq.s32.totalorder %s20, 0
      %p195 = por %p193, %p194
      %p196 = scmp.ne.s32.totalorder %s185, %s188
      %p197 = scmp.eq.s32.totalorder %s25, 1
      %p198 = por %p196, %p197
      %p199 = scmp.ne.s32.totalorder %s188, %s189
      %p200 = scmp.eq.s32.totalorder %s25, 0
      %p201 = por %p199, %p200
      %p202 = scmp.ne.s32.totalorder %s188, %s189
      %p203 = scmp.eq.s32.totalorder %s26, 1
      %p204 = por %p202, %p203
      %p206 = scmp.ne.s32.totalorder %s189, %s205
      %p207 = scmp.eq.s32.totalorder %s26, 0
      %p208 = por %p206, %p207
      %p209 = scmp.le.s32.totalorder 1, %s20
      %p210 = scmp.lt.s32.totalorder %s20, 3
      %p211 = pnand %p209, %p210
      %p212 = pneg %p211
      // Predicated region
      $region9: #{tpu_custom_call.1} parent=5 // pred_check
        _
      $region10: #{tpu_custom_call.1} parent=5 // pred_check_branch
        %214 = sbr.rel (%p211) target = $region12
      $region11: #{tpu_custom_call.1} parent=5 // pred_region
        %s215 = ssub.s32 %s20, 1
        // Predicated region
        $region13: #{tpu_custom_call.1} parent=11 // pred_check
          %p216 = pneg %p86
        $region14: #{tpu_custom_call.1} parent=11 // pred_check_branch
          %218 = sbr.rel (%p216) target = $region16
        $region15: #{tpu_custom_call.1} parent=11 // pred_region
          %s219 = smul.u32 32, %s30
          %s221 = ssub.s32 4096, 4096
          %222 = vsyncadd [#allocation4], %s221
          %s223 = smul.addr %s219, 128
          %s224 = scalar_lea.hbm %s1, %s223
          %s225 = sshll.u32 [#allocation3], 4
          %s226 = int_to_ptr.vmem [resolvable:$true] %s225
          %231 = dma.hbm_to_vmem [thread:$0]  %s224, 4096, %s226, [#allocation4], 128, 128, 8
        $region16: #{tpu_custom_call.1} parent=11 // pred_fallthru
          _
        // Predicated region
        $region17: #{tpu_custom_call.1} parent=11 // pred_check
          %p232 = pneg %p107
        $region18: #{tpu_custom_call.1} parent=11 // pred_check_branch
          %234 = sbr.rel (%p232) target = $region20
        $region19: #{tpu_custom_call.1} parent=11 // pred_region
          _
        $region20: #{tpu_custom_call.1} parent=11 // pred_fallthru
          _
        // Predicated region
        $region21: #{tpu_custom_call.1} parent=11 // pred_check
          %p235 = pneg %p128
        $region22: #{tpu_custom_call.1} parent=11 // pred_check_branch
          %237 = sbr.rel (%p235) target = $region24
        $region23: #{tpu_custom_call.1} parent=11 // pred_region
          _
        $region24: #{tpu_custom_call.1} parent=11 // pred_fallthru
          _
        // Predicated region
        $region25: #{tpu_custom_call.1} parent=11 // pred_check
          %p238 = pneg %p149
        $region26: #{tpu_custom_call.1} parent=11 // pred_check_branch
          %240 = sbr.rel (%p238) target = $region28
        $region27: #{tpu_custom_call.1} parent=11 // pred_region
          _
        $region28: #{tpu_custom_call.1} parent=11 // pred_fallthru
          _
      $region12: #{tpu_custom_call.1} parent=5 // pred_fallthru
        _
      %p241 = scmp.lt.s32.totalorder %s20, 2
      // Predicated region
      $region29: #{tpu_custom_call.1} parent=5 // pred_check
        %p242 = pneg %p241
      $region30: #{tpu_custom_call.1} parent=5 // pred_check_branch
        %244 = sbr.rel (%p242) target = $region32
      $region31: #{tpu_custom_call.1} parent=5 // pred_region
        // Predicated region
        $region33: #{tpu_custom_call.1} parent=31 // pred_check
          %p245 = pneg %p54
        $region34: #{tpu_custom_call.1} parent=31 // pred_check_branch
          %247 = sbr.rel (%p245) target = $region36
        $region35: #{tpu_custom_call.1} parent=31 // pred_region
          %s248 = smul.u32 2, %s28
          %p249 = scmp.lt.s32.totalorder %s27, 1
          %s250 = scalar_select %p249, %s27, 1
          %p251 = scmp.lt.s32.totalorder %s248, 1
          %s252 = scalar_select %p251, %s248, 1
          %s253 = smul.addr %s250, 2
          %s254 = sadd.s32 %s252, %s253
          %s255 = smul.addr %s254, 4
          %s256 = scalar_lea.vmem %s0, %s255
          %s257 = smul.u32 2, %s28
        $region36: #{tpu_custom_call.1} parent=31 // pred_fallthru
          _
      $region32: #{tpu_custom_call.1} parent=5 // pred_fallthru
        _
      %p258 = scmp.le.s32.totalorder 1, %s20
      %p259 = scmp.lt.s32.totalorder %s20, 3
      %p260 = pnand %p258, %p259
      %p261 = pneg %p260
      // Predicated region
      $region37: #{tpu_custom_call.1} parent=5 // pred_check
        _
      $region38: #{tpu_custom_call.1} parent=5 // pred_check_branch
        %263 = sbr.rel (%p260) target = $region40
      $region39: #{tpu_custom_call.1} parent=5 // pred_region
        %s264 = ssub.s32 %s20, 1
        // Predicated region
        $region41: #{tpu_custom_call.1} parent=39 // pred_check
          %p265 = pneg %p86
        $region42: #{tpu_custom_call.1} parent=39 // pred_check_branch
          %267 = sbr.rel (%p265) target = $region44
        $region43: #{tpu_custom_call.1} parent=39 // pred_region
          %268 = dma.done [#allocation4], 4096
        $region44: #{tpu_custom_call.1} parent=39 // pred_fallthru
          _
        %s269 = smul.u32 2, %s30
        %p270 = scmp.lt.s32.totalorder %s29, 1
        %s271 = scalar_select %p270, %s29, 1
        %p272 = scmp.lt.s32.totalorder %s269, 1
        %s273 = scalar_select %p272, %s269, 1
        %s274 = smul.addr %s271, 2
        %s275 = sadd.s32 %s273, %s274
        %s276 = smul.addr %s275, 4
        %s277 = scalar_lea.vmem %s0, %s276
        %p278 = pneg %p60
        %p279 = pneg %p57
        %p280 = pneg %p86
        %p281 = pneg %p83
        %p282 = pneg %p107
        %p283 = pneg %p104
        %p284 = pneg %p128
        %p285 = pneg %p125
        %p286 = pneg %p149
        %p287 = pneg %p146
        %p288 = pneg %p175
        %p289 = pneg %p172
        %s290 = sand.u32 %s162, 1
        %s291 = scalar_lea.sflag [#allocation5], %s290
        %s292 = sand.u32 %s162, 1
        %s293 = smul.addr %s292, 8
        %s294 = scalar_lea.vmem [#allocation6], %s293
        %p295 = pneg %p201
        %p296 = pneg %p198
        %s297 = sand.u32 %s188, 1
        %s298 = scalar_lea.sflag [#allocation8], %s297
        %s299 = sand.u32 %s188, 1
        %s300 = smul.addr %s299, 8
        %s301 = scalar_lea.vmem [#allocation7], %s300
        %s302 = smul.u32 2, %s30
        %p303 = scmp.lt.s32.totalorder %s29, 1
        %s304 = scalar_select %p303, %s29, 1
        %p305 = scmp.lt.s32.totalorder %s302, 1
        %s306 = scalar_select %p305, %s302, 1
        %s307 = smul.addr %s304, 2
        %s308 = sadd.s32 %s306, %s307
        %s309 = smul.addr %s308, 4
        %s310 = scalar_lea.vmem %s0, %s309
        %s311 = smul.u32 2, %s30
        %s312 = smul.u32 32, %s30
        %p313 = scmp.eq.s32.totalorder %s30, 0
        // Predicated region
        $region45: #{tpu_custom_call.1} parent=39 // pred_check
          %p314 = pneg %p313
        $region46: #{tpu_custom_call.1} parent=39 // pred_check_branch
          %316 = sbr.rel (%p314) target = $region48
        $region47: #{tpu_custom_call.1} parent=39 // pred_region
          %317 = vst [vmem:[#allocation2] sm:$0xf] 0.0
        $region48: #{tpu_custom_call.1} parent=39 // pred_fallthru
          _
        %v318 = vld [vmem:[%s310] sm:$0xff]
        %v319 = vld [vmem:[#allocation3] sm:$0xff]
        %v320 = vld [vmem:[#allocation3 + $0x8] sm:$0xff]
        %v321 = vld [vmem:[#allocation3 + $0x10] sm:$0xff]
        %v322 = vld [vmem:[#allocation3 + $0x18] sm:$0xff]
        %v323 = vld [vmem:[#allocation3 + $0x20] sm:$0xff]
        %v324 = vld [vmem:[#allocation3 + $0x28] sm:$0xff]
        %v325 = vld [vmem:[#allocation3 + $0x30] sm:$0xff]
        %v326 = vld [vmem:[#allocation3 + $0x38] sm:$0xff]
        %v327 = vld [vmem:[#allocation3 + $0x40] sm:$0xff]
        %v328 = vld [vmem:[#allocation3 + $0x48] sm:$0xff]
        %v329 = vld [vmem:[#allocation3 + $0x50] sm:$0xff]
        %v330 = vld [vmem:[#allocation3 + $0x58] sm:$0xff]
        %v331 = vld [vmem:[#allocation3 + $0x60] sm:$0xff]
        %v332 = vld [vmem:[#allocation3 + $0x68] sm:$0xff]
        %v333 = vld [vmem:[#allocation3 + $0x70] sm:$0xff]
        %v334 = vld [vmem:[#allocation3 + $0x78] sm:$0xff]
        %v335 = vld [vmem:[#allocation3 + $0x80] sm:$0xff]
        %v336 = vld [vmem:[#allocation3 + $0x88] sm:$0xff]
        %v337 = vld [vmem:[#allocation3 + $0x90] sm:$0xff]
        %v338 = vld [vmem:[#allocation3 + $0x98] sm:$0xff]
        %v339 = vld [vmem:[#allocation3 + $0xa0] sm:$0xff]
        %v340 = vld [vmem:[#allocation3 + $0xa8] sm:$0xff]
        %v341 = vld [vmem:[#allocation3 + $0xb0] sm:$0xff]
        %v342 = vld [vmem:[#allocation3 + $0xb8] sm:$0xff]
        %v343 = vld [vmem:[#allocation3 + $0xc0] sm:$0xff]
        %v344 = vld [vmem:[#allocation3 + $0xc8] sm:$0xff]
        %v345 = vld [vmem:[#allocation3 + $0xd0] sm:$0xff]
        %v346 = vld [vmem:[#allocation3 + $0xd8] sm:$0xff]
        %v347 = vld [vmem:[#allocation3 + $0xe0] sm:$0xff]
        %v348 = vld [vmem:[#allocation3 + $0xe8] sm:$0xff]
        %v349 = vld [vmem:[#allocation3 + $0xf0] sm:$0xff]
        %v350 = vld [vmem:[#allocation3 + $0xf8] sm:$0xff]
        %v351 = vld [vmem:[#allocation2] sm:$0xf]
        %v353 = vcombine.high %v318, %v318
        %355 = vmatprep.subr.mxu0 0.0
        %356 = vmatpush1.msra.mxu0 %v319
        %357 = vmatprep.subr.mxu0 0.0
        %358 = vmatpush1.msra.mxu0 %v320
        %359 = vmatprep.subr.mxu0 0.0
        %360 = vmatpush1.msra.mxu0 %v321
        %361 = vmatprep.subr.mxu0 0.0
        %362 = vmatpush1.msra.mxu0 %v322
        %363 = vmatprep.subr.mxu0 0.0
        %364 = vmatpush1.msra.mxu0 %v323
        %365 = vmatprep.subr.mxu0 0.0
        %366 = vmatpush1.msra.mxu0 %v324
        %367 = vmatprep.subr.mxu0 0.0
        %368 = vmatpush1.msra.mxu0 %v325
        %369 = vmatprep.subr.mxu0 0.0
        %370 = vmatpush1.msra.mxu0 %v326
        %371 = vmatprep.subr.mxu0 0.0
        %372 = vmatpush1.msra.mxu0 %v327
        %373 = vmatprep.subr.mxu0 0.0
        %374 = vmatpush1.msra.mxu0 %v328
        %375 = vmatprep.subr.mxu0 0.0
        %376 = vmatpush1.msra.mxu0 %v329
        %377 = vmatprep.subr.mxu0 0.0
        %378 = vmatpush1.msra.mxu0 %v330
        %379 = vmatprep.subr.mxu0 0.0
        %380 = vmatpush1.msra.mxu0 %v331
        %381 = vmatprep.subr.mxu0 0.0
        %382 = vmatpush1.msra.mxu0 %v332
        %383 = vmatprep.subr.mxu0 0.0
        %384 = vmatpush1.msra.mxu0 %v333
        %385 = vmatprep.subr.mxu0 0.0
        %386 = vmatpush1.msra.mxu0 %v334
        %387 = vmatprep.subr.mxu0 0.0
        %388 = vmatpush1.msra.mxu0 %v335
        %389 = vmatprep.subr.mxu0 0.0
        %390 = vmatpush1.msra.mxu0 %v336
        %391 = vmatprep.subr.mxu0 0.0
        %392 = vmatpush1.msra.mxu0 %v337
        %393 = vmatprep.subr.mxu0 0.0
        %394 = vmatpush1.msra.mxu0 %v338
        %395 = vmatprep.subr.mxu0 0.0
        %396 = vmatpush1.msra.mxu0 %v339
        %397 = vmatprep.subr.mxu0 0.0
        %398 = vmatpush1.msra.mxu0 %v340
        %399 = vmatprep.subr.mxu0 0.0
        %400 = vmatpush1.msra.mxu0 %v341
        %401 = vmatprep.subr.mxu0 0.0
        %402 = vmatpush1.msra.mxu0 %v342
        %403 = vmatprep.subr.mxu0 0.0
        %404 = vmatpush1.msra.mxu0 %v343
        %405 = vmatprep.subr.mxu0 0.0
        %406 = vmatpush1.msra.mxu0 %v344
        %407 = vmatprep.subr.mxu0 0.0
        %408 = vmatpush1.msra.mxu0 %v345
        %409 = vmatprep.subr.mxu0 0.0
        %410 = vmatpush1.msra.mxu0 %v346
        %411 = vmatprep.subr.mxu0 0.0
        %412 = vmatpush1.msra.mxu0 %v347
        %413 = vmatprep.subr.mxu0 0.0
        %414 = vmatpush1.msra.mxu0 %v348
        %415 = vmatprep.subr.mxu0 0.0
        %416 = vmatpush1.msra.mxu0 %v349
        %417 = vmatprep.subr.mxu0 0.0
        %418 = vmatpush1.msra.mxu0 %v350
        %419 = vmatprep.mubr.f32.mxu0 %v353
        %420 = vmatmul.mubr.f32.gmra.mrb[0].mxu0 %v318
        %v421 = vpop.f32.mrb[0].mxu0
        %v422 = vadd.f32 0.0, %v421
        %v423 = vpop.f32.mrb[0].mxu0
        %424 = vdwg.mxu0
        %v425 = vadd.f32 %v351, %v422
        %426 = vst [vmem:[#allocation2] sm:$0xf] %v425
        // Predicated region
        $region49: #{tpu_custom_call.1} parent=39 // pred_check
          %p427 = pneg %p313
        $region50: #{tpu_custom_call.1} parent=39 // pred_check_branch
          %429 = sbr.rel (%p427) target = $region52
        $region51: #{tpu_custom_call.1} parent=39 // pred_region
          %v430 = vld [vmem:[#allocation2] sm:$0xf]
          %v431 = vld [vmem:[%s2] sm:$0xff]
          %v432 = vld [vmem:[%s2 + $0x8] sm:$0xff]
          %vm433 = vcmask 31744
          %v435 = vsel %vm433, %v431, 0
          %v438 = vsel %vm433, %v432, 0
          %vm440 = vcmask 1043456
          %v442 = vsel %vm440, %v430, 0
          %444 = vmatprep.subr.mxu0 0.0
          %445 = vmatpush1.msra.mxu0 %v442
          %446 = vmatprep.subr.mxu0 0.0
          %447 = vmatpush1.msra.mxu0 0.0
          %448 = vmatprep.subr.mxu0 0.0
          %449 = vmatpush1.msra.mxu0 0.0
          %450 = vmatprep.subr.mxu0 0.0
          %451 = vmatpush1.msra.mxu0 0.0
          %452 = vmatprep.subr.mxu0 0.0
          %453 = vmatpush1.msra.mxu0 0.0
          %454 = vmatprep.subr.mxu0 0.0
          %455 = vmatpush1.msra.mxu0 0.0
          %456 = vmatprep.subr.mxu0 0.0
          %457 = vmatpush1.msra.mxu0 0.0
          %458 = vmatprep.subr.mxu0 0.0
          %459 = vmatpush1.msra.mxu0 0.0
          %460 = vmatprep.subr.mxu0 0.0
          %461 = vmatpush1.msra.mxu0 0.0
          %462 = vmatprep.subr.mxu0 0.0
          %463 = vmatpush1.msra.mxu0 0.0
          %464 = vmatprep.subr.mxu0 0.0
          %465 = vmatpush1.msra.mxu0 0.0
          %466 = vmatprep.subr.mxu0 0.0
          %467 = vmatpush1.msra.mxu0 0.0
          %468 = vmatprep.subr.mxu0 0.0
          %469 = vmatpush1.msra.mxu0 0.0
          %470 = vmatprep.subr.mxu0 0.0
          %471 = vmatpush1.msra.mxu0 0.0
          %472 = vmatprep.subr.mxu0 0.0
          %473 = vmatpush1.msra.mxu0 0.0
          %474 = vmatprep.subr.mxu0 0.0
          %475 = vmatpush1.msra.mxu0 0.0
          %476 = vmatprep.subr.mxu0 0.0
          %477 = vmatpush1.msra.mxu0 0.0
          %478 = vmatprep.subr.mxu0 0.0
          %479 = vmatpush1.msra.mxu0 0.0
          %480 = vmatprep.subr.mxu0 0.0
          %481 = vmatpush1.msra.mxu0 0.0
          %482 = vmatprep.subr.mxu0 0.0
          %483 = vmatpush1.msra.mxu0 0.0
          %484 = vmatprep.subr.mxu0 0.0
          %485 = vmatpush1.msra.mxu0 0.0
          %486 = vmatprep.subr.mxu0 0.0
          %487 = vmatpush1.msra.mxu0 0.0
          %488 = vmatprep.subr.mxu0 0.0
          %489 = vmatpush1.msra.mxu0 0.0
          %490 = vmatprep.subr.mxu0 0.0
          %491 = vmatpush1.msra.mxu0 0.0
          %492 = vmatprep.subr.mxu0 0.0
          %493 = vmatpush1.msra.mxu0 0.0
          %494 = vmatprep.subr.mxu0 0.0
          %495 = vmatpush1.msra.mxu0 0.0
          %496 = vmatprep.subr.mxu0 0.0
          %497 = vmatpush1.msra.mxu0 0.0
          %498 = vmatprep.subr.mxu0 0.0
          %499 = vmatpush1.msra.mxu0 0.0
          %500 = vmatprep.subr.mxu0 0.0
          %501 = vmatpush1.msra.mxu0 0.0
          %502 = vmatprep.subr.mxu0 0.0
          %503 = vmatpush1.msra.mxu0 0.0
          %504 = vmatprep.subr.mxu0 0.0
          %505 = vmatpush1.msra.mxu0 0.0
          %506 = vmatprep.subr.mxu0 0.0
          %507 = vmatpush1.msra.mxu0 0.0
          %508 = vmatprep.mubr.f32.mxu0 0.0
          %509 = vmatmul.mubr.f32.gmra.mrb[0].mxu0 %v435
          %v510 = vpop.f32.mrb[0].mxu0
          %v511 = vadd.f32 0.0, %v510
          %v512 = vpop.f32.mrb[0].mxu0
          %513 = vmatprep.mubr.f32.mxu0 0.0
          %514 = vmatmul.mubr.f32.gmra.mrb[0].mxu0 %v438
          %v515 = vpop.f32.mrb[0].mxu0
          %v516 = vadd.f32 0.0, %v515
          %v517 = vpop.f32.mrb[0].mxu0
          %518 = vdwg.mxu0
          %v519 = vld [vmem:[%s3] sm:$0xff]
          %521 = vset.pattern.permute.xlu0 0
          %522 = vperm.xlu0 %521, %v519
          %v523 = vpop.permute.xlu0 %522
          %v525 = vadd.f32 %v511, %v523
          %v526 = vmul.f32 %v525, 0.35355338
          %527 = vst [vmem:[%s294] sm:$0xff] %v526
          %v528 = vld [vmem:[%s4] sm:$0xff]
          %530 = vset.pattern.permute.xlu0 0
          %531 = vperm.xlu0 %530, %v528
          %v532 = vpop.permute.xlu0 %531
          %v534 = vadd.f32 %v516, %v532
          %535 = vst [vmem:[%s301] sm:$0xff] %v534
        $region52: #{tpu_custom_call.1} parent=39 // pred_fallthru
          _
        %s536 = sand.u32 %s162, 1
        %s537 = scalar_lea.sflag [#allocation5], %s536
        %s538 = sand.u32 %s162, 1
        %s539 = smul.addr %s538, 8
        %s540 = scalar_lea.vmem [#allocation6], %s539
        %s541 = sand.u32 %s188, 1
        %s542 = scalar_lea.sflag [#allocation8], %s541
        %s543 = sand.u32 %s188, 1
        %s544 = smul.addr %s543, 8
        %s545 = scalar_lea.vmem [#allocation7], %s544
        // Predicated region
        $region53: #{tpu_custom_call.1} parent=39 // pred_check
          %p546 = pneg %p172
        $region54: #{tpu_custom_call.1} parent=39 // pred_check_branch
          %548 = sbr.rel (%p546) target = $region56
        $region55: #{tpu_custom_call.1} parent=39 // pred_region
          %s550 = ssub.s32 128, 128
          %551 = vsyncadd %s537, %s550
          %s552 = smul.addr %s29, 128
          %s553 = scalar_lea.hbm %s5, %s552
          %s555 = sshll.u32 %s540, 4
          %s556 = int_to_ptr.vmem [resolvable:$true] %s555
          %558 = dma.vmem_to_hbm [thread:$0]  %s556, 128, %s553, %s537
        $region56: #{tpu_custom_call.1} parent=39 // pred_fallthru
          _
        // Predicated region
        $region57: #{tpu_custom_call.1} parent=39 // pred_check
          %p559 = pneg %p198
        $region58: #{tpu_custom_call.1} parent=39 // pred_check_branch
          %561 = sbr.rel (%p559) target = $region60
        $region59: #{tpu_custom_call.1} parent=39 // pred_region
          %s563 = ssub.s32 128, 128
          %564 = vsyncadd %s542, %s563
          %s565 = smul.addr %s29, 128
          %s566 = scalar_lea.hbm %s6, %s565
          %s568 = sshll.u32 %s545, 4
          %s569 = int_to_ptr.vmem [resolvable:$true] %s568
          %571 = dma.vmem_to_hbm [thread:$0]  %s569, 128, %s566, %s542
        $region60: #{tpu_custom_call.1} parent=39 // pred_fallthru
          _
      $region40: #{tpu_custom_call.1} parent=5 // pred_fallthru
        _
      %p572 = scmp.le.s32.totalorder 2, %s20
      // Predicated region
      $region61: #{tpu_custom_call.1} parent=5 // pred_check
        %p573 = pneg %p572
      $region62: #{tpu_custom_call.1} parent=5 // pred_check_branch
        %575 = sbr.rel (%p573) target = $region64
      $region63: #{tpu_custom_call.1} parent=5 // pred_region
        %s576 = ssub.s32 %s20, 2
        // Predicated region
        $region65: #{tpu_custom_call.1} parent=63 // pred_check
          %p577 = pneg %p178
        $region66: #{tpu_custom_call.1} parent=63 // pred_check_branch
          %579 = sbr.rel (%p577) target = $region68
        $region67: #{tpu_custom_call.1} parent=63 // pred_region
          %s580 = sand.u32 %s163, 1
          %s581 = scalar_lea.sflag [#allocation5], %s580
          %s582 = sand.u32 %s163, 1
          %s583 = smul.addr %s582, 8
          %s584 = scalar_lea.vmem [#allocation6], %s583
          %585 = dma.done %s581, 128
        $region68: #{tpu_custom_call.1} parent=63 // pred_fallthru
          _
        // Predicated region
        $region69: #{tpu_custom_call.1} parent=63 // pred_check
          %p586 = pneg %p204
        $region70: #{tpu_custom_call.1} parent=63 // pred_check_branch
          %588 = sbr.rel (%p586) target = $region72
        $region71: #{tpu_custom_call.1} parent=63 // pred_region
          %s589 = sand.u32 %s189, 1
          %s590 = scalar_lea.sflag [#allocation8], %s589
          %s591 = sand.u32 %s189, 1
          %s592 = smul.addr %s591, 8
          %s593 = scalar_lea.vmem [#allocation7], %s592
          %594 = dma.done %s590, 128
        $region72: #{tpu_custom_call.1} parent=63 // pred_fallthru
          _
      $region64: #{tpu_custom_call.1} parent=5 // pred_fallthru
        _
    $region6: #{tpu_custom_call.1} parent=1 // loop_footer
      %s24 = sadd.s32 1, %s20
    $region7: #{tpu_custom_call.1} parent=1 // loop_footer_branch
      %19 = sbr.rel target = $region3
    $region8: #{tpu_custom_call.1} parent=1 // loop_exit
      _
    %595 = vsyncpa [#allocation4], 1
    %s596 = scalar_lea.sflag [#allocation4], 1
    %597 = vsyncpa %s596, 1
    %598 = vsyncpa [#allocation5], 1
    %s599 = scalar_lea.sflag [#allocation5], 1
    %600 = vsyncpa %s599, 1
    %601 = vsyncpa [#allocation8], 1
    %s602 = scalar_lea.sflag [#allocation8], 1
    %603 = vsyncpa %s602, 1

</llo_original>
